<compile_context>
chip_gen: v7x
topology: tpu7x:2x2x1
jax: 0.10.0
libtpu: 0.0.40
codegen_flags: <defaults>
</compile_context>

<pallas_src>
from collections import OrderedDict

import jax
import jax.numpy as jnp
import numpy as np
from jax.experimental import pallas as pl
from jax.experimental.pallas import tpu as pltpu


def _span_embed_kernel(seq_ref, starts_ref, ends_ref, smask_ref, w_ref, out_ref):
    # Block shapes:
    #   seq_ref    : (TB, S, D)     native dtype (f32 or bf16) -- no in-VMEM upcast
    #   starts_ref : (TB, N, 1)     i32  inclusive span start
    #   ends_ref   : (TB, N, 1)     i32  inclusive span end (already end-1)
    #   smask_ref  : (TB, N, 1)     f32  span mask
    #   w_ref      : (K, D)         seq dtype, all per-key global-attention weights
    #   out_ref    : (TB, K*N, D)   seq dtype
    seq = seq_ref[...]                                   # native dtype, fed to both matmuls
    TB, S, D = seq.shape
    K = w_ref.shape[0]
    N = starts_ref.shape[1]

    # (1) All-key per-token logits in ONE MXU matmul, f32 accumulation.
    #     K rows is ~1% MXU fill either orientation; this is the proven-lowering form.
    #     (If profiling shows an XLU transpose of the seq tile, switch to "bsd,dk->bsk".)
    logits = jnp.einsum("kd,bsd->kbs", w_ref[...], seq,
                        preferred_element_type=jnp.float32)          # (K, TB, S) f32

    # (2) Span-membership additive bias, computed once and shared across all keys.
    pos = jax.lax.broadcasted_iota(jnp.int32, (1, 1, S), 2)          # (1, 1, S)
    in_span = (pos >= starts_ref[...]) & (pos <= ends_ref[...])      # (TB, N, S)
    span_bias = jnp.where(in_span, 0.0, -1e30).astype(jnp.float32)   # (TB, N, S)
    smask = smask_ref[...]                                           # (TB, N, 1)

    # (3) Per-key masked-softmax numerators; normalization is deferred past the matmul.
    #     K = number of label keys, tiny and static -> unrolled Python loop of VPU/EUP ops.
    p_parts = []
    scale_parts = []
    for k in range(K):
        masked = logits[k][:, None, :] + span_bias       # (TB, N, S)
        mx = jnp.max(masked, axis=-1, keepdims=True)     # (TB, N, 1)
        # exp(-1e30 - mx) underflows to exactly 0 => out-of-span positions excluded.
        p = jnp.exp(masked - mx)                         # (TB, N, S)
        denom = jnp.sum(p, axis=-1, keepdims=True)       # >= 1 always
        p_parts.append(p)
        # softmax 1/denom (EUP approx reciprocal) and the span mask folded into ONE
        # per-(key, span) scale applied to the matmul result below.
        scale_parts.append(smask * pl.reciprocal(denom, approx=True))

    p_all = jnp.concatenate(p_parts, axis=1)             # (TB, K*N, S) f32
    scale = jnp.concatenate(scale_parts, axis=1)         # (TB, K*N, 1) f32

    # (4) ONE weighted-sum matmul for all keys: seq goes through the MXU once per batch
    #     row with effective M = K*N (instead of K separate M=N matmuls).
    emb = jnp.einsum("bms,bsd->bmd", p_all.astype(seq.dtype), seq,
                     preferred_element_type=jnp.float32)             # (TB, K*N, D) f32

    # (5) Normalize + mask + single contiguous store.
    out_ref[...] = (emb * scale).astype(out_ref.dtype)


def _vmem_budget_bytes():
    """Scoped-VMEM budget: ~3/4 of physical per-core VMEM, capped at 100 MiB.
    Lands at ~96 MiB on 128 MiB v5e/v6e parts and ~48 MiB on v7x's 64 MiB/TC parts.
    Falls back to 48 MiB if the hardware query is unavailable."""
    try:
        cap = getattr(pltpu.get_tpu_info(), "vmem_capacity_bytes", None)
    except Exception:
        cap = None
    if not cap:
        cap = 64 * 1024 * 1024
    return int(min(cap * 3 // 4, 100 * 1024 * 1024))


def _kernel_footprint_bytes(tb, S, D, N, K, seq_bytes, out_bytes):
    """Rough per-grid-step VMEM footprint (double-buffered blocks + live intermediates)."""
    blocks = (2 * tb * S * D * seq_bytes           # double-buffered seq input block
              + 2 * tb * K * N * D * out_bytes     # double-buffered output block
              + 2 * 3 * tb * N * 4)                # starts / ends / span-mask blocks
    live = (K * tb * S * 4                         # logits
            + 2 * tb * N * S * 4                   # in_span + span_bias
            + 2 * K * tb * N * S * 4               # per-key numerators + concatenated p_all
            + tb * S * D * seq_bytes               # seq working copy in vregs
            + 2 * tb * K * N * D * 4)              # emb + scaled result (f32)
    return blocks + int(1.25 * live)               # headroom for spills / temporaries


def _pick_batch_block(B, S, D, N, K, seq_bytes, out_bytes, budget):
    """Largest TB dividing B whose footprint fits the VMEM budget, while keeping
    grid = B // TB >= 2 (so the 'parallel' axis can shard across both v7x TensorCores)."""
    best = 1
    for tb in range(1, B + 1):
        if B % tb:
            continue
        if B >= 2 and B // tb < 2:
            continue
        if _kernel_footprint_bytes(tb, S, D, N, K, seq_bytes, out_bytes) <= budget:
            best = tb
    return best


def span_embedder_multi(seq_tensor, span_indices, span_mask, attn_w, attn_b, keys,
                        *, batch_block=None):
    """
    seq_tensor  : (B, S, D)  float32 / bfloat16 (fed to the MXU in its native dtype)
    span_indices: (B, N, 2)  int, end-exclusive
    span_mask   : (B, N)     float
    attn_w      : (K, D)     per-key global-attention weights
    attn_b      : (K,)       per-key biases (softmax is shift-invariant -> provably a no-op)
    keys        : list of K label names
    Returns OrderedDict{key: (B, N, D)} in seq_tensor's dtype.
    """
    del attn_b  # softmax is shift-invariant: the per-key bias never affects the output
    B, S, D = seq_tensor.shape
    N = span_indices.shape[1]
    K = len(keys)
    out_dtype = seq_tensor.dtype
    seq_bytes = seq_tensor.dtype.itemsize
    out_bytes = jnp.dtype(out_dtype).itemsize

    budget = _vmem_budget_bytes()
    if batch_block is None:
        TB = _pick_batch_block(B, S, D, N, K, seq_bytes, out_bytes, budget)
    else:
        TB = batch_block if (batch_block > 0 and B % batch_block == 0) else 1
    grid = (B // TB,)

    # Scale the scoped-VMEM limit with the actual footprint (never below the safe 32 MiB,
    # never above the per-generation budget).
    vmem_limit = int(min(budget, max(32 * 1024 * 1024,
                                     2 * _kernel_footprint_bytes(TB, S, D, N, K,
                                                                 seq_bytes, out_bytes))))

    starts = span_indices[..., 0:1].astype(jnp.int32)            # (B, N, 1)
    ends = (span_indices[..., 1:2] - 1).astype(jnp.int32)        # (B, N, 1) inclusive ends
    smask = span_mask.astype(jnp.float32)[..., None]             # (B, N, 1)
    w = attn_w.astype(seq_tensor.dtype)                          # (K, D) native dtype for MXU

    out_flat = pl.pallas_call(
        _span_embed_kernel,
        out_shape=jax.ShapeDtypeStruct((B, K * N, D), out_dtype),
        grid=grid,
        in_specs=[
            pl.BlockSpec((TB, S, D), lambda b: (b, 0, 0)),       # seq (native dtype)
            pl.BlockSpec((TB, N, 1), lambda b: (b, 0, 0)),       # starts
            pl.BlockSpec((TB, N, 1), lambda b: (b, 0, 0)),       # ends (inclusive)
            pl.BlockSpec((TB, N, 1), lambda b: (b, 0, 0)),       # span mask
            pl.BlockSpec((K, D), lambda b: (0, 0)),              # all attention weights
        ],
        out_specs=pl.BlockSpec((TB, K * N, D), lambda b: (b, 0, 0)),
        compiler_params=pltpu.CompilerParams(
            dimension_semantics=("parallel",),
            vmem_limit_bytes=vmem_limit,
        ),
    )(seq_tensor, starts, ends, smask, w)

    # TODO(synk): for production D < 128 the per-row store is lane-sparse (masked vst);
    # packing the (K*N, D) block into a lane-dense multiple-of-128 slab would shave
    # store-side overhead but needs an in-kernel relayout, skipped for robustness.
    return OrderedDict(
        (key, out_flat[:, i * N:(i + 1) * N, :]) for i, key in enumerate(keys))


def _reference(seq, span_indices, span_mask, attn_w, attn_b, keys):
    """Pure-numpy reference of SpanEmbedderMulti.forward (project=False)."""
    seq = np.asarray(seq, np.float32)
    B, S, D = seq.shape
    starts = np.asarray(span_indices[..., 0])
    ends = np.asarray(span_indices[..., 1]) - 1
    out = OrderedDict()
    for ki, key in enumerate(keys):
        w = np.asarray(attn_w[ki], np.float32)
        b = float(attn_b[ki])
        logits = seq @ w + b                               # (B, S)
        res = np.zeros((B, starts.shape[1], D), np.float32)
        for bb in range(B):
            for n in range(starts.shape[1]):
                s0, e0 = int(starts[bb, n]), int(ends[bb, n])
                idx = np.arange(s0, e0 + 1)
                lg = logits[bb, idx]
                p = np.exp(lg - lg.max())
                p = p / p.sum()
                res[bb, n] = (p[:, None] * seq[bb, idx]).sum(0)
                res[bb, n] *= float(span_mask[bb, n])
        out[key] = res
    return out


if __name__ == "__main__":
    # Small deterministic problem: B=2, S=16, D=32, N=8 spans, 2 label keys.
    B, S, D, N = 2, 16, 32, 8
    keys = ["trigger", "argument"]
    K = len(keys)

    root = jax.random.PRNGKey(0)
    k_seq, k_start, k_len, k_mask, k_w, k_b = jax.random.split(root, 6)

    seq_tensor = jax.random.normal(k_seq, (B, S, D), dtype=jnp.float32)

    span_starts = jax.random.randint(k_start, (B, N), 0, S - 4)
    span_lens = jax.random.randint(k_len, (B, N), 1, 5)          # width 1..4
    span_ends_excl = span_starts + span_lens                      # end-exclusive (<= S)
    span_indices = jnp.stack([span_starts, span_ends_excl], axis=-1).astype(jnp.int32)

    span_mask = (jax.random.uniform(k_mask, (B, N)) > 0.3).astype(jnp.float32)

    # Deterministic per-key global-attention parameters (TimeDistributed Linear(D, 1)).
    attn_w = 0.1 * jax.random.normal(k_w, (K, D), dtype=jnp.float32)
    attn_b = 0.1 * jax.random.normal(k_b, (K,), dtype=jnp.float32)

    # TODO(synk): project=True path (FeedForward + activation + dropout) not exercised;
    # SpanEmbedderMulti defaults to project=False (output_dim == input_dim).

    out = span_embedder_multi(seq_tensor, span_indices, span_mask, attn_w, attn_b, keys)
    for v in out.values():
        jax.block_until_ready(v)

    ref = _reference(np.asarray(seq_tensor), np.asarray(span_indices),
                     np.asarray(span_mask), np.asarray(attn_w), np.asarray(attn_b), keys)
    # Tolerance covers the EUP approx reciprocal used for the softmax denominator
    # (weights sum to ~1 +/- 1e-3; error stays << 1e-2).
    for key in keys:
        np.testing.assert_allclose(np.asarray(out[key]), ref[key], rtol=1e-2, atol=1e-2)

    print("KERNEL_OK")
</pallas_src>

<mosaic_0001>
module attributes {stable_mosaic.version = 11 : i64} {
  func.func @_span_embed_kernel(%arg0: i32, %arg1: memref<1x16x32xf32, #tpu.memory_space<vmem>>, %arg2: memref<1x8x1xi32, #tpu.memory_space<vmem>>, %arg3: memref<1x8x1xi32, #tpu.memory_space<vmem>>, %arg4: memref<1x8x1xf32, #tpu.memory_space<vmem>>, %arg5: memref<2x32xf32, #tpu.memory_space<vmem>>, %arg6: memref<1x16x32xf32, #tpu.memory_space<vmem>>) attributes {dimension_semantics = [#tpu.dimension_semantics<parallel>], iteration_bounds = array<i64: 2>, scalar_prefetch = 0 : i64, scratch_operands = 0 : i64, tpu.core_type = #tpu.core_type<tc>, window_params = [{transform_indices = @transform_0, window_bounds = array<i64: 1, 16, 32>}, {transform_indices = @transform_1, window_bounds = array<i64: 1, 8, 1>}, {transform_indices = @transform_2, window_bounds = array<i64: 1, 8, 1>}, {transform_indices = @transform_3, window_bounds = array<i64: 1, 8, 1>}, {pipeline_mode = #tpu.pipeline_mode<synchronous>, transform_indices = @transform_4, window_bounds = array<i64: 2, 32>}, {transform_indices = @transform_5, window_bounds = array<i64: 1, 16, 32>}]} {
    %c0 = arith.constant 0 : index
    %c0_0 = arith.constant 0 : index
    %c0_1 = arith.constant 0 : index
    %0 = vector.load %arg1[%c0, %c0_0, %c0_1] : memref<1x16x32xf32, #tpu.memory_space<vmem>>, vector<1x16x32xf32>
    %c0_2 = arith.constant 0 : index
    %c0_3 = arith.constant 0 : index
    %1 = vector.load %arg5[%c0_2, %c0_3] : memref<2x32xf32, #tpu.memory_space<vmem>>, vector<2x32xf32>
    "tpu.trace_start"() <{level = 10 : i32, message = "kd,bsd->kbs"}> : () -> ()
    %cst = arith.constant dense<0.000000e+00> : vector<2x1x16xf32>
    %2 = tpu.matmul %1, %0, %cst {dimension_numbers = #tpu.dot_dimension_numbers<[1], [2], [0], [0, 1], [0, 0, 1, 0, 1, 1], [], []>} : vector<2x32xf32>, vector<1x16x32xf32>, vector<2x1x16xf32> -> vector<2x1x16xf32>
    "tpu.trace_stop"() : () -> ()
    %3 = tpu.iota {dimensions = array<i32: 2>} : vector<1x1x16xi32>
    %c0_4 = arith.constant 0 : index
    %c0_5 = arith.constant 0 : index
    %c0_6 = arith.constant 0 : index
    %4 = vector.load %arg2[%c0_4, %c0_5, %c0_6] : memref<1x8x1xi32, #tpu.memory_space<vmem>>, vector<1x8x1xi32>
    %5 = vector.broadcast %3 : vector<1x1x16xi32> to vector<1x8x16xi32>
    %6 = vector.broadcast %4 : vector<1x8x1xi32> to vector<1x8x16xi32>
    %7 = arith.cmpi sge, %5, %6 : vector<1x8x16xi32>
    %c0_7 = arith.constant 0 : index
    %c0_8 = arith.constant 0 : index
    %c0_9 = arith.constant 0 : index
    %8 = vector.load %arg3[%c0_7, %c0_8, %c0_9] : memref<1x8x1xi32, #tpu.memory_space<vmem>>, vector<1x8x1xi32>
    %9 = vector.broadcast %3 : vector<1x1x16xi32> to vector<1x8x16xi32>
    %10 = vector.broadcast %8 : vector<1x8x1xi32> to vector<1x8x16xi32>
    %11 = arith.cmpi sle, %9, %10 : vector<1x8x16xi32>
    %12 = arith.andi %7, %11 : vector<1x8x16xi1>
    %cst_10 = arith.constant 0.000000e+00 : f32
    %cst_11 = arith.constant -1.000000e+30 : f32
    %13 = vector.broadcast %cst_10 : f32 to vector<1x8x16xf32>
    %14 = vector.broadcast %cst_11 : f32 to vector<1x8x16xf32>
    %15 = arith.select %12, %13, %14 : vector<1x8x16xi1>, vector<1x8x16xf32>
    %c0_12 = arith.constant 0 : index
    %c0_13 = arith.constant 0 : index
    %c0_14 = arith.constant 0 : index
    %16 = vector.load %arg4[%c0_12, %c0_13, %c0_14] : memref<1x8x1xf32, #tpu.memory_space<vmem>>, vector<1x8x1xf32>
    %17 = vector.extract_strided_slice %2 {offsets = [0, 0, 0], sizes = [1, 1, 16], strides = [1, 1, 1]} : vector<2x1x16xf32> to vector<1x1x16xf32>
    %18 = vector.shape_cast %17 : vector<1x1x16xf32> to vector<1x16xf32>
    %19 = vector.shape_cast %18 : vector<1x16xf32> to vector<1x1x16xf32>
    %20 = vector.broadcast %19 : vector<1x1x16xf32> to vector<1x8x16xf32>
    %21 = arith.addf %20, %15 : vector<1x8x16xf32>
    %cst_15 = arith.constant dense<0xFF800000> : vector<1x8xf32>
    %22 = vector.multi_reduction <maximumf>, %21, %cst_15 [2] : vector<1x8x16xf32> to vector<1x8xf32>
    %23 = vector.shape_cast %22 : vector<1x8xf32> to vector<1x8x1xf32>
    %24 = vector.broadcast %23 : vector<1x8x1xf32> to vector<1x8x16xf32>
    %25 = arith.subf %21, %24 : vector<1x8x16xf32>
    %26 = math.exp %25 : vector<1x8x16xf32>
    %cst_16 = arith.constant dense<0.000000e+00> : vector<1x8xf32>
    %27 = vector.multi_reduction <add>, %26, %cst_16 [2] : vector<1x8x16xf32> to vector<1x8xf32>
    %28 = vector.shape_cast %27 : vector<1x8xf32> to vector<1x8x1xf32>
    %29 = tpu.reciprocal %28 {approx = true} : vector<1x8x1xf32> -> vector<1x8x1xf32>
    %30 = arith.mulf %16, %29 : vector<1x8x1xf32>
    %31 = vector.extract_strided_slice %2 {offsets = [1, 0, 0], sizes = [1, 1, 16], strides = [1, 1, 1]} : vector<2x1x16xf32> to vector<1x1x16xf32>
    %32 = vector.shape_cast %31 : vector<1x1x16xf32> to vector<1x16xf32>
    %33 = vector.shape_cast %32 : vector<1x16xf32> to vector<1x1x16xf32>
    %34 = vector.broadcast %33 : vector<1x1x16xf32> to vector<1x8x16xf32>
    %35 = arith.addf %34, %15 : vector<1x8x16xf32>
    %cst_17 = arith.constant dense<0xFF800000> : vector<1x8xf32>
    %36 = vector.multi_reduction <maximumf>, %35, %cst_17 [2] : vector<1x8x16xf32> to vector<1x8xf32>
    %37 = vector.shape_cast %36 : vector<1x8xf32> to vector<1x8x1xf32>
    %38 = vector.broadcast %37 : vector<1x8x1xf32> to vector<1x8x16xf32>
    %39 = arith.subf %35, %38 : vector<1x8x16xf32>
    %40 = math.exp %39 : vector<1x8x16xf32>
    %cst_18 = arith.constant dense<0.000000e+00> : vector<1x8xf32>
    %41 = vector.multi_reduction <add>, %40, %cst_18 [2] : vector<1x8x16xf32> to vector<1x8xf32>
    %42 = vector.shape_cast %41 : vector<1x8xf32> to vector<1x8x1xf32>
    %43 = tpu.reciprocal %42 {approx = true} : vector<1x8x1xf32> -> vector<1x8x1xf32>
    %44 = arith.mulf %16, %43 : vector<1x8x1xf32>
    %45 = tpu.concatenate %26, %40 in 1 : vector<1x8x16xf32>, vector<1x8x16xf32> -> vector<1x16x16xf32>
    %46 = tpu.concatenate %30, %44 in 1 : vector<1x8x1xf32>, vector<1x8x1xf32> -> vector<1x16x1xf32>
    "tpu.trace_start"() <{level = 10 : i32, message = "bms,bsd->bmd"}> : () -> ()
    %cst_19 = arith.constant dense<0.000000e+00> : vector<1x16x32xf32>
    %47 = tpu.matmul %45, %0, %cst_19 {dimension_numbers = #tpu.dot_dimension_numbers<[2], [1], [1], [2], [0, 0, 0, 1, 1, 2], [0], [0]>} : vector<1x16x16xf32>, vector<1x16x32xf32>, vector<1x16x32xf32> -> vector<1x16x32xf32>
    "tpu.trace_stop"() : () -> ()
    %48 = vector.broadcast %46 : vector<1x16x1xf32> to vector<1x16x32xf32>
    %49 = arith.mulf %47, %48 : vector<1x16x32xf32>
    %c0_20 = arith.constant 0 : index
    %c0_21 = arith.constant 0 : index
    %c0_22 = arith.constant 0 : index
    %50 = vector.load %arg6[%c0_20, %c0_21, %c0_22] : memref<1x16x32xf32, #tpu.memory_space<vmem>>, vector<1x16x32xf32>
    tpu.vector_store %arg6[%c0_20, %c0_21, %c0_22], %49 {strides = array<i32>} : memref<1x16x32xf32, #tpu.memory_space<vmem>>, vector<1x16x32xf32>,
    return
  }
  func.func @transform_0(%arg0: i32) -> (i32, i32, i32) {
    %c0_i32 = arith.constant 0 : i32
    %c0_i32_0 = arith.constant 0 : i32
    %c0_i32_1 = arith.constant 0 : i32
    return %arg0, %c0_i32, %c0_i32_0 : i32, i32, i32
  }
  func.func @transform_1(%arg0: i32) -> (i32, i32, i32) {
    %c0_i32 = arith.constant 0 : i32
    %c0_i32_0 = arith.constant 0 : i32
    %c0_i32_1 = arith.constant 0 : i32
    return %arg0, %c0_i32, %c0_i32_0 : i32, i32, i32
  }
  func.func @transform_2(%arg0: i32) -> (i32, i32, i32) {
    %c0_i32 = arith.constant 0 : i32
    %c0_i32_0 = arith.constant 0 : i32
    %c0_i32_1 = arith.constant 0 : i32
    return %arg0, %c0_i32, %c0_i32_0 : i32, i32, i32
  }
  func.func @transform_3(%arg0: i32) -> (i32, i32, i32) {
    %c0_i32 = arith.constant 0 : i32
    %c0_i32_0 = arith.constant 0 : i32
    %c0_i32_1 = arith.constant 0 : i32
    return %arg0, %c0_i32, %c0_i32_0 : i32, i32, i32
  }
  func.func @transform_4(%arg0: i32) -> (i32, i32) {
    %c0_i32 = arith.constant 0 : i32
    %c0_i32_0 = arith.constant 0 : i32
    %c0_i32_1 = arith.constant 0 : i32
    return %c0_i32, %c0_i32_0 : i32, i32
  }
  func.func @transform_5(%arg0: i32) -> (i32, i32, i32) {
    %c0_i32 = arith.constant 0 : i32
    %c0_i32_0 = arith.constant 0 : i32
    %c0_i32_1 = arith.constant 0 : i32
    return %arg0, %c0_i32, %c0_i32_0 : i32, i32, i32
  }
}

</mosaic_0001>

<llo_original>
// kernel: tpu_custom_call.1
$region0: #{tpu_custom_call.1}
  #allocation0 [shape = 'u32[]', space=smem, size = 0x4, offset = 0x4, fixed_abs, tag = 'smem constant byte address 0x4 - core index']
  #allocation1 [shape = 'u32[144,128]{1,0:T(1,128)}', space=vmem, size = 0x12000, scoped, tag = 'internal scratch']
  %s0 = inlined_call_operand.vmem [shape: f32[2,16,32], index: 0, kind: input, shape index: {}]
  %s1 = inlined_call_operand.vmem [shape: s32[2,8,1], index: 1, kind: input, shape index: {}]
  %s2 = inlined_call_operand.vmem [shape: s32[2,8,1], index: 2, kind: input, shape index: {}]
  %s3 = inlined_call_operand.vmem [shape: f32[2,8,1], index: 3, kind: input, shape index: {}]
  %s4 = inlined_call_operand.vmem [shape: f32[2,32], index: 4, kind: input, shape index: {}]
  %s5 = inlined_call_operand.hbm [shape: f32[2,16,32], index: 5, kind: output, shape index: {}]
  %s6 = sld [smem:[#allocation0]]
  $region53: #{tpu_custom_call.1} parent=0
    _
  %s8 = ssub.s32 1, %s6
  %s9 = scalar_select 0, %s8, %s6
  $region1: #{tpu_custom_call.1} parent=0
    #allocation2 [shape = 'u8[16384]{0}', space=vmem, size = 0x4000, scoped, tag = 'output window, operand 0']
    #allocation3 [shape = 's32[2]{0}', space=sflag, size = 0x8, scoped, tag = 'scoped memory for tpu_custom_call.1']
    %10 = vsyncpa [#allocation3], 0
    %s11 = scalar_lea.sflag [#allocation3], 1
    %12 = vsyncpa %s11, 0
    loop: start=0, step=1, limit=4
    $region2: #{tpu_custom_call.1} parent=1 // loop_pre_header
      _
    $region3: #{tpu_custom_call.1} parent=1 // loop_header
      %s14 = sphi 0, %s18
      %p15 = scmp.ge.s32.totalorder %s14, 4
      %s24 = sphi 0, %s26
      %s27 = sphi 0, %s24
      %s28 = sphi 0, %s27
      %s44 = sphi 0, %s28
      %s50 = sphi 0, %s52
      %s53 = sphi 0, %s50
      %s54 = sphi 0, %s53
      %s70 = sphi 0, %s54
      %s76 = sphi 0, %s78
      %s79 = sphi 0, %s76
      %s80 = sphi 0, %s79
      %s96 = sphi 0, %s80
      %s102 = sphi 0, %s104
      %s105 = sphi 0, %s102
      %s106 = sphi 0, %s105
      %s122 = sphi 0, %s106
      %s126 = sphi 0, %s126
      %s128 = sphi 0, %s126
      %s129 = sphi 0, %s128
      %s143 = sphi 0, %s129
      %s149 = sphi 0, %s151
      %s152 = sphi 0, %s149
      %s153 = sphi 0, %s152
      %s169 = sphi 0, %s153
    $region4: #{tpu_custom_call.1} parent=1 // loop_header_branch
      %17 = sbr.rel (%p15) target = $region8
    $region5: #{tpu_custom_call.1} parent=1 // loop_body
      %s19 = ssub.s32 %s14, 1
      %s20 = ssub.s32 %s14, 2
      %s21 = sadd.s32 %s14, 1
      %s22 = ssub.s32 %s14, %s21
      %p23 = scmp.eq.s32.totalorder %s22, 0
      %s25 = sadd.s32 %s24, 1
      %s26 = scalar_select %p23, %s24, %s25
      %p29 = pneg %p23
      %p30 = scmp.eq.s32.totalorder %s14, 1
      %p31 = por %p29, %p30
      %p32 = scmp.ne.s32.totalorder %s24, %s27
      %p33 = scmp.eq.s32.totalorder %s14, 0
      %p34 = por %p32, %p33
      %p35 = scmp.ne.s32.totalorder %s24, %s27
      %p36 = scmp.eq.s32.totalorder %s19, 1
      %p37 = por %p35, %p36
      %p38 = scmp.ne.s32.totalorder %s27, %s28
      %p39 = scmp.eq.s32.totalorder %s19, 0
      %p40 = por %p38, %p39
      %p41 = scmp.ne.s32.totalorder %s27, %s28
      %p42 = scmp.eq.s32.totalorder %s20, 1
      %p43 = por %p41, %p42
      %p45 = scmp.ne.s32.totalorder %s28, %s44
      %p46 = scmp.eq.s32.totalorder %s20, 0
      %p47 = por %p45, %p46
      %s48 = ssub.s32 %s14, %s21
      %p49 = scmp.eq.s32.totalorder %s48, 0
      %s51 = sadd.s32 %s50, 1
      %s52 = scalar_select %p49, %s50, %s51
      %p55 = pneg %p49
      %p56 = scmp.eq.s32.totalorder %s14, 1
      %p57 = por %p55, %p56
      %p58 = scmp.ne.s32.totalorder %s50, %s53
      %p59 = scmp.eq.s32.totalorder %s14, 0
      %p60 = por %p58, %p59
      %p61 = scmp.ne.s32.totalorder %s50, %s53
      %p62 = scmp.eq.s32.totalorder %s19, 1
      %p63 = por %p61, %p62
      %p64 = scmp.ne.s32.totalorder %s53, %s54
      %p65 = scmp.eq.s32.totalorder %s19, 0
      %p66 = por %p64, %p65
      %p67 = scmp.ne.s32.totalorder %s53, %s54
      %p68 = scmp.eq.s32.totalorder %s20, 1
      %p69 = por %p67, %p68
      %p71 = scmp.ne.s32.totalorder %s54, %s70
      %p72 = scmp.eq.s32.totalorder %s20, 0
      %p73 = por %p71, %p72
      %s74 = ssub.s32 %s14, %s21
      %p75 = scmp.eq.s32.totalorder %s74, 0
      %s77 = sadd.s32 %s76, 1
      %s78 = scalar_select %p75, %s76, %s77
      %p81 = pneg %p75
      %p82 = scmp.eq.s32.totalorder %s14, 1
      %p83 = por %p81, %p82
      %p84 = scmp.ne.s32.totalorder %s76, %s79
      %p85 = scmp.eq.s32.totalorder %s14, 0
      %p86 = por %p84, %p85
      %p87 = scmp.ne.s32.totalorder %s76, %s79
      %p88 = scmp.eq.s32.totalorder %s19, 1
      %p89 = por %p87, %p88
      %p90 = scmp.ne.s32.totalorder %s79, %s80
      %p91 = scmp.eq.s32.totalorder %s19, 0
      %p92 = por %p90, %p91
      %p93 = scmp.ne.s32.totalorder %s79, %s80
      %p94 = scmp.eq.s32.totalorder %s20, 1
      %p95 = por %p93, %p94
      %p97 = scmp.ne.s32.totalorder %s80, %s96
      %p98 = scmp.eq.s32.totalorder %s20, 0
      %p99 = por %p97, %p98
      %s100 = ssub.s32 %s14, %s21
      %p101 = scmp.eq.s32.totalorder %s100, 0
      %s103 = sadd.s32 %s102, 1
      %s104 = scalar_select %p101, %s102, %s103
      %p107 = pneg %p101
      %p108 = scmp.eq.s32.totalorder %s14, 1
      %p109 = por %p107, %p108
      %p110 = scmp.ne.s32.totalorder %s102, %s105
      %p111 = scmp.eq.s32.totalorder %s14, 0
      %p112 = por %p110, %p111
      %p113 = scmp.ne.s32.totalorder %s102, %s105
      %p114 = scmp.eq.s32.totalorder %s19, 1
      %p115 = por %p113, %p114
      %p116 = scmp.ne.s32.totalorder %s105, %s106
      %p117 = scmp.eq.s32.totalorder %s19, 0
      %p118 = por %p116, %p117
      %p119 = scmp.ne.s32.totalorder %s105, %s106
      %p120 = scmp.eq.s32.totalorder %s20, 1
      %p121 = por %p119, %p120
      %p123 = scmp.ne.s32.totalorder %s106, %s122
      %p124 = scmp.eq.s32.totalorder %s20, 0
      %p125 = por %p123, %p124
      %s127 = sadd.s32 %s126, 1
      %p130 = scmp.eq.s32.totalorder %s14, 1
      %p131 = scmp.ne.s32.totalorder %s126, %s128
      %p132 = scmp.eq.s32.totalorder %s14, 0
      %p133 = por %p131, %p132
      %p134 = scmp.ne.s32.totalorder %s126, %s128
      %p135 = scmp.eq.s32.totalorder %s19, 1
      %p136 = por %p134, %p135
      %p137 = scmp.ne.s32.totalorder %s128, %s129
      %p138 = scmp.eq.s32.totalorder %s19, 0
      %p139 = por %p137, %p138
      %p140 = scmp.ne.s32.totalorder %s128, %s129
      %p141 = scmp.eq.s32.totalorder %s20, 1
      %p142 = por %p140, %p141
      %p144 = scmp.ne.s32.totalorder %s129, %s143
      %p145 = scmp.eq.s32.totalorder %s20, 0
      %p146 = por %p144, %p145
      %s147 = ssub.s32 %s14, %s21
      %p148 = scmp.eq.s32.totalorder %s147, 0
      %s150 = sadd.s32 %s149, 1
      %s151 = scalar_select %p148, %s149, %s150
      %p154 = pneg %p148
      %p155 = scmp.eq.s32.totalorder %s14, 1
      %p156 = por %p154, %p155
      %p157 = scmp.ne.s32.totalorder %s149, %s152
      %p158 = scmp.eq.s32.totalorder %s14, 0
      %p159 = por %p157, %p158
      %p160 = scmp.ne.s32.totalorder %s149, %s152
      %p161 = scmp.eq.s32.totalorder %s19, 1
      %p162 = por %p160, %p161
      %p163 = scmp.ne.s32.totalorder %s152, %s153
      %p164 = scmp.eq.s32.totalorder %s19, 0
      %p165 = por %p163, %p164
      %p166 = scmp.ne.s32.totalorder %s152, %s153
      %p167 = scmp.eq.s32.totalorder %s20, 1
      %p168 = por %p166, %p167
      %p170 = scmp.ne.s32.totalorder %s153, %s169
      %p171 = scmp.eq.s32.totalorder %s20, 0
      %p172 = por %p170, %p171
      %p173 = scmp.le.s32.totalorder 1, %s14
      %p174 = scmp.lt.s32.totalorder %s14, 3
      %p175 = pnand %p173, %p174
      %p176 = pneg %p175
      // Predicated region
      $region9: #{tpu_custom_call.1} parent=5 // pred_check
        _
      $region10: #{tpu_custom_call.1} parent=5 // pred_check_branch
        %178 = sbr.rel (%p175) target = $region12
      $region11: #{tpu_custom_call.1} parent=5 // pred_region
        %s179 = ssub.s32 %s14, 1
        // Predicated region
        $region13: #{tpu_custom_call.1} parent=11 // pred_check
          %p180 = pneg %p139
        $region14: #{tpu_custom_call.1} parent=11 // pred_check_branch
          %182 = sbr.rel (%p180) target = $region16
        $region15: #{tpu_custom_call.1} parent=11 // pred_region
          _
        $region16: #{tpu_custom_call.1} parent=11 // pred_fallthru
          _
      $region12: #{tpu_custom_call.1} parent=5 // pred_fallthru
        _
      %p183 = scmp.lt.s32.totalorder %s14, 2
      // Predicated region
      $region17: #{tpu_custom_call.1} parent=5 // pred_check
        %p184 = pneg %p183
      $region18: #{tpu_custom_call.1} parent=5 // pred_check_branch
        %186 = sbr.rel (%p184) target = $region20
      $region19: #{tpu_custom_call.1} parent=5 // pred_region
        // Predicated region
        $region21: #{tpu_custom_call.1} parent=19 // pred_check
          %p187 = pneg %p34
        $region22: #{tpu_custom_call.1} parent=19 // pred_check_branch
          %189 = sbr.rel (%p187) target = $region24
        $region23: #{tpu_custom_call.1} parent=19 // pred_region
          %p190 = scmp.lt.s32.totalorder %s14, 1
          %s191 = scalar_select %p190, %s14, 1
          %s192 = smul.addr %s191, 2
          %s193 = smul.addr %s192, 8
          %s194 = scalar_lea.vmem %s0, %s193
        $region24: #{tpu_custom_call.1} parent=19 // pred_fallthru
          _
        // Predicated region
        $region25: #{tpu_custom_call.1} parent=19 // pred_check
          %p195 = pneg %p60
        $region26: #{tpu_custom_call.1} parent=19 // pred_check_branch
          %197 = sbr.rel (%p195) target = $region28
        $region27: #{tpu_custom_call.1} parent=19 // pred_region
          %p198 = scmp.lt.s32.totalorder %s14, 1
          %s199 = scalar_select %p198, %s14, 1
          %s200 = smul.addr %s199, 8
          %s201 = scalar_lea.vmem %s1, %s200
        $region28: #{tpu_custom_call.1} parent=19 // pred_fallthru
          _
        // Predicated region
        $region29: #{tpu_custom_call.1} parent=19 // pred_check
          %p202 = pneg %p86
        $region30: #{tpu_custom_call.1} parent=19 // pred_check_branch
          %204 = sbr.rel (%p202) target = $region32
        $region31: #{tpu_custom_call.1} parent=19 // pred_region
          %p205 = scmp.lt.s32.totalorder %s14, 1
          %s206 = scalar_select %p205, %s14, 1
          %s207 = smul.addr %s206, 8
          %s208 = scalar_lea.vmem %s2, %s207
        $region32: #{tpu_custom_call.1} parent=19 // pred_fallthru
          _
        // Predicated region
        $region33: #{tpu_custom_call.1} parent=19 // pred_check
          %p209 = pneg %p112
        $region34: #{tpu_custom_call.1} parent=19 // pred_check_branch
          %211 = sbr.rel (%p209) target = $region36
        $region35: #{tpu_custom_call.1} parent=19 // pred_region
          %p212 = scmp.lt.s32.totalorder %s14, 1
          %s213 = scalar_select %p212, %s14, 1
          %s214 = smul.addr %s213, 8
          %s215 = scalar_lea.vmem %s3, %s214
        $region36: #{tpu_custom_call.1} parent=19 // pred_fallthru
          _
      $region20: #{tpu_custom_call.1} parent=5 // pred_fallthru
        _
      %p216 = scmp.le.s32.totalorder 1, %s14
      %p217 = scmp.lt.s32.totalorder %s14, 3
      %p218 = pnand %p216, %p217
      %p219 = pneg %p218
      // Predicated region
      $region37: #{tpu_custom_call.1} parent=5 // pred_check
        _
      $region38: #{tpu_custom_call.1} parent=5 // pred_check_branch
        %221 = sbr.rel (%p218) target = $region40
      $region39: #{tpu_custom_call.1} parent=5 // pred_region
        %s222 = ssub.s32 %s14, 1
        %p223 = scmp.lt.s32.totalorder %s19, 1
        %s224 = scalar_select %p223, %s19, 1
        %s225 = smul.addr %s224, 2
        %s226 = smul.addr %s225, 8
        %s227 = scalar_lea.vmem %s0, %s226
        %p228 = pneg %p40
        %p229 = pneg %p37
        %p230 = scmp.lt.s32.totalorder %s19, 1
        %s231 = scalar_select %p230, %s19, 1
        %s232 = smul.addr %s231, 8
        %s233 = scalar_lea.vmem %s1, %s232
        %p234 = pneg %p66
        %p235 = pneg %p63
        %p236 = scmp.lt.s32.totalorder %s19, 1
        %s237 = scalar_select %p236, %s19, 1
        %s238 = smul.addr %s237, 8
        %s239 = scalar_lea.vmem %s2, %s238
        %p240 = pneg %p92
        %p241 = pneg %p89
        %p242 = scmp.lt.s32.totalorder %s19, 1
        %s243 = scalar_select %p242, %s19, 1
        %s244 = smul.addr %s243, 8
        %s245 = scalar_lea.vmem %s3, %s244
        %p246 = pneg %p118
        %p247 = pneg %p115
        %p248 = pneg %p139
        %p249 = pneg %p136
        %p250 = pneg %p165
        %p251 = pneg %p162
        %s252 = sand.u32 %s152, 1
        %s253 = scalar_lea.sflag [#allocation3], %s252
        %s254 = sand.u32 %s152, 1
        %s255 = smul.addr %s254, 16
        %s256 = scalar_lea.vmem [#allocation2], %s255
        %p257 = scmp.lt.s32.totalorder %s19, 1
        %s258 = scalar_select %p257, %s19, 1
        %s259 = smul.addr %s258, 2
        %s260 = smul.addr %s259, 8
        %s261 = scalar_lea.vmem %s0, %s260
        %p262 = scmp.lt.s32.totalorder %s19, 1
        %s263 = scalar_select %p262, %s19, 1
        %s264 = smul.addr %s263, 8
        %s265 = scalar_lea.vmem %s1, %s264
        %p266 = scmp.lt.s32.totalorder %s19, 1
        %s267 = scalar_select %p266, %s19, 1
        %s268 = smul.addr %s267, 8
        %s269 = scalar_lea.vmem %s2, %s268
        %p270 = scmp.lt.s32.totalorder %s19, 1
        %s271 = scalar_select %p270, %s19, 1
        %s272 = smul.addr %s271, 8
        %s273 = scalar_lea.vmem %s3, %s272
        %v274 = vld [vmem:[%s261] sm:$0xff]
        %v275 = vld [vmem:[%s261 + $0x8] sm:$0xff]
        %v276 = vld [vmem:[%s4] sm:$0x3]
        %vm277 = vcmask 261120
        %v279 = vsel %vm277, %v276, 0
        %v282 = vsel %vm277, %v274, 0
        %v285 = vsel %vm277, %v275, 0
        %287 = vmatprep.subr.mxu0 0.0
        %288 = vmatpush1.xpose.msra.mxu0 %v282
        %289 = vmatprep.subr.mxu0 0.0
        %290 = vmatpush1.xpose.msra.mxu0 %v285
        %291 = vmatprep.subr.mxu0 0.0
        %292 = vmatpush1.xpose.msra.mxu0 0.0
        %293 = vmatprep.subr.mxu0 0.0
        %294 = vmatpush1.xpose.msra.mxu0 0.0
        %295 = vmatprep.subr.mxu0 0.0
        %296 = vmatpush1.xpose.msra.mxu0 0.0
        %297 = vmatprep.subr.mxu0 0.0
        %298 = vmatpush1.xpose.msra.mxu0 0.0
        %299 = vmatprep.subr.mxu0 0.0
        %300 = vmatpush1.xpose.msra.mxu0 0.0
        %301 = vmatprep.subr.mxu0 0.0
        %302 = vmatpush1.xpose.msra.mxu0 0.0
        %303 = vmatprep.subr.mxu0 0.0
        %304 = vmatpush1.xpose.msra.mxu0 0.0
        %305 = vmatprep.subr.mxu0 0.0
        %306 = vmatpush1.xpose.msra.mxu0 0.0
        %307 = vmatprep.subr.mxu0 0.0
        %308 = vmatpush1.xpose.msra.mxu0 0.0
        %309 = vmatprep.subr.mxu0 0.0
        %310 = vmatpush1.xpose.msra.mxu0 0.0
        %311 = vmatprep.subr.mxu0 0.0
        %312 = vmatpush1.xpose.msra.mxu0 0.0
        %313 = vmatprep.subr.mxu0 0.0
        %314 = vmatpush1.xpose.msra.mxu0 0.0
        %315 = vmatprep.subr.mxu0 0.0
        %316 = vmatpush1.xpose.msra.mxu0 0.0
        %317 = vmatprep.subr.mxu0 0.0
        %318 = vmatpush1.xpose.msra.mxu0 0.0
        %319 = vmatprep.subr.mxu0 0.0
        %320 = vmatpush1.xpose.msra.mxu0 0.0
        %321 = vmatprep.subr.mxu0 0.0
        %322 = vmatpush1.xpose.msra.mxu0 0.0
        %323 = vmatprep.subr.mxu0 0.0
        %324 = vmatpush1.xpose.msra.mxu0 0.0
        %325 = vmatprep.subr.mxu0 0.0
        %326 = vmatpush1.xpose.msra.mxu0 0.0
        %327 = vmatprep.subr.mxu0 0.0
        %328 = vmatpush1.xpose.msra.mxu0 0.0
        %329 = vmatprep.subr.mxu0 0.0
        %330 = vmatpush1.xpose.msra.mxu0 0.0
        %331 = vmatprep.subr.mxu0 0.0
        %332 = vmatpush1.xpose.msra.mxu0 0.0
        %333 = vmatprep.subr.mxu0 0.0
        %334 = vmatpush1.xpose.msra.mxu0 0.0
        %335 = vmatprep.subr.mxu0 0.0
        %336 = vmatpush1.xpose.msra.mxu0 0.0
        %337 = vmatprep.subr.mxu0 0.0
        %338 = vmatpush1.xpose.msra.mxu0 0.0
        %339 = vmatprep.subr.mxu0 0.0
        %340 = vmatpush1.xpose.msra.mxu0 0.0
        %341 = vmatprep.subr.mxu0 0.0
        %342 = vmatpush1.xpose.msra.mxu0 0.0
        %343 = vmatprep.subr.mxu0 0.0
        %344 = vmatpush1.xpose.msra.mxu0 0.0
        %345 = vmatprep.subr.mxu0 0.0
        %346 = vmatpush1.xpose.msra.mxu0 0.0
        %347 = vmatprep.subr.mxu0 0.0
        %348 = vmatpush1.xpose.msra.mxu0 0.0
        %349 = vmatprep.subr.mxu0 0.0
        %350 = vmatpush1.xpose.msra.mxu0 0.0
        %351 = vmatprep.mubr.f32.mxu0 0.0
        %352 = vmatmul.mubr.f32.gmra.mrb[0].mxu0 %v279
        %v353 = vpop.f32.mrb[0].mxu0
        %v354 = vadd.f32 0.0, %v353
        %v355 = vpop.f32.mrb[0].mxu0
        %356 = vdwg.mxu0
        %v359 = vunpack.c.l.s4 1966171168
        %v360 = vunpack.c.0.s8 %v359
        %v361 = vlaneseq
        %v362 = vshrl.u32 %v361, 7
        %v363 = vsub.s32 %v360, %v362
        %v364 = vrot.slane %v354, %v363
        %v365 = vcombine.high %v364, %v364
        %v367 = vunpack.c.l.s4 1966171168
        %v368 = vunpack.c.0.s8 %v367
        %v369 = vlaneseq
        %v370 = vshrl.u32 %v369, 7
        %v371 = vsub.s32 %v368, %v370
        %v372 = vrot.slane %v364, %v371
        %v374 = vunpack.c.l.s4 1966171168
        %v375 = vunpack.c.0.s8 %v374
        %v376 = vlaneseq
        %v377 = vshrl.u32 %v376, 7
        %v378 = vsub.s32 %v375, %v377
        %v379 = vrot.slane %v365, %v378
        %v380 = vlaneseq
        %v381 = vand.u32 %v380, 127
        %v382 = vld [vmem:[%s265] sm:$0xff]
        %383 = vset.pattern.permute.xlu0 0
        %384 = vperm.xlu0 %383, %v382
        %v385 = vpop.permute.xlu0 %384
        %vm386 = vcmp.ge.s32.totalorder %v381, %v385
        %v387 = vld [vmem:[%s269] sm:$0xff]
        %388 = vset.pattern.permute.xlu0 0
        %389 = vperm.xlu0 %388, %v387
        %v390 = vpop.permute.xlu0 %389
        %vm391 = vcmp.le.s32.totalorder %v381, %v390
        %vm392 = vmand %vm386, %vm391
        %v393 = vsel %vm392, 0.0, -1e+30
        %v394 = vld [vmem:[%s273] sm:$0xff]
        %v395 = vlaneseq
        %v396 = vshrl.u32 %v395, 7
        %v397 = vsub.s32 0, %v396
        %v398 = vrot.slane %v372, %v397
        %v400 = vadd.f32 %v398, %v393
        %vm401 = vcmask 130048
        %v402 = vsel %vm401, %v400, -inf
        %403 = vmax.xlane.f32.xlu0 %v402
        %v404 = vpop.xlane.xlu0 %403
        %v405 = vsub.f32 %v400, %v404
        %v406 = vmul.f32 %v405, 1.442695
        %v407 = vpow.pop %v406
        %v408 = vsel %vm401, %v407, 0.0
        %409 = vadd.xlane.f32.xlu0 %v408
        %v410 = vpop.xlane.xlu0 %409
        %v411 = vrcp.pop %v410
        %v412 = vmul.f32 %v394, %v411
        %v413 = vlaneseq
        %v414 = vshrl.u32 %v413, 7
        %v415 = vsub.s32 0, %v414
        %v416 = vrot.slane %v379, %v415
        %v418 = vadd.f32 %v416, %v393
        %v419 = vsel %vm401, %v418, -inf
        %420 = vmax.xlane.f32.xlu0 %v419
        %v421 = vpop.xlane.xlu0 %420
        %v422 = vsub.f32 %v418, %v421
        %v423 = vmul.f32 %v422, 1.442695
        %v424 = vpow.pop %v423
        %v425 = vsel %vm401, %v424, 0.0
        %426 = vadd.xlane.f32.xlu0 %v425
        %v427 = vpop.xlane.xlu0 %426
        %v428 = vrcp.pop %v427
        %v429 = vmul.f32 %v394, %v428
        %v431 = vsel %vm401, %v407, 0
        %v434 = vsel %vm401, %v424, 0
        %436 = vmatprep.subr.mxu0 0.0
        %437 = vmatpush1.msra.mxu0 %v274
        %438 = vmatprep.subr.mxu0 0.0
        %439 = vmatpush1.msra.mxu0 %v275
        %440 = vmatprep.subr.mxu0 0.0
        %441 = vmatpush1.msra.mxu0 0.0
        %442 = vmatprep.subr.mxu0 0.0
        %443 = vmatpush1.msra.mxu0 0.0
        %444 = vmatprep.subr.mxu0 0.0
        %445 = vmatpush1.msra.mxu0 0.0
        %446 = vmatprep.subr.mxu0 0.0
        %447 = vmatpush1.msra.mxu0 0.0
        %448 = vmatprep.subr.mxu0 0.0
        %449 = vmatpush1.msra.mxu0 0.0
        %450 = vmatprep.subr.mxu0 0.0
        %451 = vmatpush1.msra.mxu0 0.0
        %452 = vmatprep.subr.mxu0 0.0
        %453 = vmatpush1.msra.mxu0 0.0
        %454 = vmatprep.subr.mxu0 0.0
        %455 = vmatpush1.msra.mxu0 0.0
        %456 = vmatprep.subr.mxu0 0.0
        %457 = vmatpush1.msra.mxu0 0.0
        %458 = vmatprep.subr.mxu0 0.0
        %459 = vmatpush1.msra.mxu0 0.0
        %460 = vmatprep.subr.mxu0 0.0
        %461 = vmatpush1.msra.mxu0 0.0
        %462 = vmatprep.subr.mxu0 0.0
        %463 = vmatpush1.msra.mxu0 0.0
        %464 = vmatprep.subr.mxu0 0.0
        %465 = vmatpush1.msra.mxu0 0.0
        %466 = vmatprep.subr.mxu0 0.0
        %467 = vmatpush1.msra.mxu0 0.0
        %468 = vmatprep.subr.mxu0 0.0
        %469 = vmatpush1.msra.mxu0 0.0
        %470 = vmatprep.subr.mxu0 0.0
        %471 = vmatpush1.msra.mxu0 0.0
        %472 = vmatprep.subr.mxu0 0.0
        %473 = vmatpush1.msra.mxu0 0.0
        %474 = vmatprep.subr.mxu0 0.0
        %475 = vmatpush1.msra.mxu0 0.0
        %476 = vmatprep.subr.mxu0 0.0
        %477 = vmatpush1.msra.mxu0 0.0
        %478 = vmatprep.subr.mxu0 0.0
        %479 = vmatpush1.msra.mxu0 0.0
        %480 = vmatprep.subr.mxu0 0.0
        %481 = vmatpush1.msra.mxu0 0.0
        %482 = vmatprep.subr.mxu0 0.0
        %483 = vmatpush1.msra.mxu0 0.0
        %484 = vmatprep.subr.mxu0 0.0
        %485 = vmatpush1.msra.mxu0 0.0
        %486 = vmatprep.subr.mxu0 0.0
        %487 = vmatpush1.msra.mxu0 0.0
        %488 = vmatprep.subr.mxu0 0.0
        %489 = vmatpush1.msra.mxu0 0.0
        %490 = vmatprep.subr.mxu0 0.0
        %491 = vmatpush1.msra.mxu0 0.0
        %492 = vmatprep.subr.mxu0 0.0
        %493 = vmatpush1.msra.mxu0 0.0
        %494 = vmatprep.subr.mxu0 0.0
        %495 = vmatpush1.msra.mxu0 0.0
        %496 = vmatprep.subr.mxu0 0.0
        %497 = vmatpush1.msra.mxu0 0.0
        %498 = vmatprep.subr.mxu0 0.0
        %499 = vmatpush1.msra.mxu0 0.0
        %500 = vmatprep.mubr.f32.mxu0 0.0
        %501 = vmatmul.mubr.f32.gmra.mrb[0].mxu0 %v431
        %v502 = vpop.f32.mrb[0].mxu0
        %v503 = vadd.f32 0.0, %v502
        %v504 = vpop.f32.mrb[0].mxu0
        %505 = vmatprep.mubr.f32.mxu0 0.0
        %506 = vmatmul.mubr.f32.gmra.mrb[0].mxu0 %v434
        %v507 = vpop.f32.mrb[0].mxu0
        %v508 = vadd.f32 0.0, %v507
        %v509 = vpop.f32.mrb[0].mxu0
        %510 = vdwg.mxu0
        %512 = vset.pattern.permute.xlu0 0
        %513 = vperm.xlu0 %512, %v412
        %v514 = vpop.permute.xlu0 %513
        %517 = vset.pattern.permute.xlu0 0
        %518 = vperm.xlu0 %517, %v429
        %v519 = vpop.permute.xlu0 %518
        %v521 = vmul.f32 %v503, %v514
        %v522 = vmul.f32 %v508, %v519
        %523 = vst.msk [vmem:[%s256] sm:$0xff] %vm277, %v521
        %524 = vst.msk [vmem:[%s256 + $0x8] sm:$0xff] %vm277, %v522
        %s525 = sand.u32 %s152, 1
        %s526 = scalar_lea.sflag [#allocation3], %s525
        %s527 = sand.u32 %s152, 1
        %s528 = smul.addr %s527, 16
        %s529 = scalar_lea.vmem [#allocation2], %s528
        // Predicated region
        $region41: #{tpu_custom_call.1} parent=39 // pred_check
          %p530 = pneg %p162
        $region42: #{tpu_custom_call.1} parent=39 // pred_check_branch
          %532 = sbr.rel (%p530) target = $region44
        $region43: #{tpu_custom_call.1} parent=39 // pred_region
          %s534 = ssub.s32 256, 256
          %535 = vsyncadd %s526, %s534
          %s536 = smul.addr %s19, 2
          %s537 = smul.addr %s536, 128
          %s538 = scalar_lea.hbm %s5, %s537
          %s539 = sshll.u32 %s529, 4
          %s540 = int_to_ptr.vmem [resolvable:$true] %s539
          %545 = dma.vmem_to_hbm [thread:$0]  %s540, 256, %s538, %s526, 128, 128, 8
        $region44: #{tpu_custom_call.1} parent=39 // pred_fallthru
          _
      $region40: #{tpu_custom_call.1} parent=5 // pred_fallthru
        _
      %p546 = scmp.le.s32.totalorder 2, %s14
      // Predicated region
      $region45: #{tpu_custom_call.1} parent=5 // pred_check
        %p547 = pneg %p546
      $region46: #{tpu_custom_call.1} parent=5 // pred_check_branch
        %549 = sbr.rel (%p547) target = $region48
      $region47: #{tpu_custom_call.1} parent=5 // pred_region
        %s550 = ssub.s32 %s14, 2
        // Predicated region
        $region49: #{tpu_custom_call.1} parent=47 // pred_check
          %p551 = pneg %p168
        $region50: #{tpu_custom_call.1} parent=47 // pred_check_branch
          %553 = sbr.rel (%p551) target = $region52
        $region51: #{tpu_custom_call.1} parent=47 // pred_region
          %s554 = sand.u32 %s153, 1
          %s555 = scalar_lea.sflag [#allocation3], %s554
          %s556 = sand.u32 %s153, 1
          %s557 = smul.addr %s556, 16
          %s558 = scalar_lea.vmem [#allocation2], %s557
          %559 = dma.done %s555, 256
        $region52: #{tpu_custom_call.1} parent=47 // pred_fallthru
          _
      $region48: #{tpu_custom_call.1} parent=5 // pred_fallthru
        _
    $region6: #{tpu_custom_call.1} parent=1 // loop_footer
      %s18 = sadd.s32 1, %s14
    $region7: #{tpu_custom_call.1} parent=1 // loop_footer_branch
      %13 = sbr.rel target = $region3
    $region8: #{tpu_custom_call.1} parent=1 // loop_exit
      _
    %560 = vsyncpa [#allocation3], 1
    %s561 = scalar_lea.sflag [#allocation3], 1
    %562 = vsyncpa %s561, 1

</llo_original>
